<compile_context>
chip_gen: v7x
topology: tpu7x:2x2x1
jax: 0.10.0
libtpu: 0.0.40
codegen_flags: <defaults>
</compile_context>

<pallas_src>
import jax
import jax.numpy as jnp
from jax.experimental import pallas as pl
from jax.experimental.pallas import tpu as pltpu

HIDDEN = 128
_LANE = 128
_SUBLANE_F32 = 8
_SPLIT_MIN_ROWS = 256  # only force >=2 grid steps (v7x dual-TC) if each tile keeps >= this many rows


def _round_up(x: int, m: int) -> int:
    return ((x + m - 1) // m) * m


def _sublane(dtype) -> int:
    # Sublane pack for the activation dtype: 8 for 4-byte, 16 for 2-byte, 32 for 1-byte.
    return max(_SUBLANE_F32, 32 // jnp.dtype(dtype).itemsize)


def _pick_tile_b(B: int, requested: int, sub: int) -> int:
    requested = max(sub, requested)
    if B > requested:
        # Multiple tiles; partial last block is handled by Pallas (masked writes).
        return _round_up(requested, sub)
    if B >= 2 * _SPLIT_MIN_ROWS:
        # Batch fits one tile but is big enough to split across v7x's 2 TensorCores.
        return _round_up(pl.cdiv(B, 2), sub)
    # Single full-extent block (block dims == array dims is always layout-legal).
    return B


def _qvalue_kernel(x_ref, w1_ref, b1_ref, w2_ref, b2_ref, out_ref):
    # Per grid step:
    #   x_ref : (tile_b, S)   input dtype (f32)      b1_ref: (1, HIDDEN) f32
    #   w1_ref: (S, HIDDEN)   compute dtype          b2_ref: (1, A)      f32
    #   w2_ref: (HIDDEN, A_pad) compute dtype (lane-padded weight, padded cols = 0)
    #   out_ref:(tile_b, A)   f32  (UNPADDED action dim)
    a = out_ref.shape[-1]
    # In-kernel cast to the compute dtype (VPU slack is huge; saves an HBM pass).
    x = x_ref[...].astype(w1_ref.dtype)
    # Layer 1 on the MXU, f32 accumulation; bias + ReLU on the VPU in f32.
    h = jnp.dot(x, w1_ref[...], preferred_element_type=jnp.float32)
    h = jnp.maximum(h + b1_ref[...], 0.0)
    # Layer 2: 128-wide MXU tile internally (costs nothing), f32 accumulation.
    q = jnp.dot(h.astype(w2_ref.dtype), w2_ref[...],
                preferred_element_type=jnp.float32)
    # Store only the real A columns — no lane-padded writeback to HBM.
    out_ref[...] = (q[:, :a] + b2_ref[...]).astype(out_ref.dtype)


def qvalue_forward(state, w1, b1, w2, b2, *, tile_b=1024,
                   compute_dtype=jnp.float32):
    """state: (B, S); w1: (S,128); b1: (128,); w2: (128,A); b2: (A,). Returns (B, A) f32."""
    B, S = state.shape
    A = w2.shape[1]
    assert w1.shape == (S, HIDDEN) and b1.shape == (HIDDEN,)
    assert w2.shape == (HIDDEN, A) and b2.shape == (A,)

    tile_b = _pick_tile_b(B, tile_b, _sublane(state.dtype))
    grid = (pl.cdiv(B, tile_b),)

    # Lane-pad only the tiny second-layer weight (zero columns); the padded columns
    # never reach HBM on the output side. Weight casts here are ~80 KiB — negligible;
    # cache pre-cast copies upstream if this is called in a tight training loop.
    A_pad = _round_up(A, _LANE)
    w1c = w1.astype(compute_dtype)
    w2c = w2.astype(compute_dtype)
    if A_pad != A:
        w2c = jnp.pad(w2c, ((0, 0), (0, A_pad - A)))
    b1r = b1.astype(jnp.float32).reshape(1, HIDDEN)
    b2r = b2.astype(jnp.float32).reshape(1, A)

    return pl.pallas_call(
        _qvalue_kernel,
        out_shape=jax.ShapeDtypeStruct((B, A), jnp.float32),
        grid=grid,
        in_specs=[
            pl.BlockSpec((tile_b, S), lambda i: (i, 0)),       # activations: tiled over batch
            pl.BlockSpec((S, HIDDEN), lambda i: (0, 0)),       # w1: VMEM-resident
            pl.BlockSpec((1, HIDDEN), lambda i: (0, 0)),       # b1
            pl.BlockSpec((HIDDEN, A_pad), lambda i: (0, 0)),   # w2 (lane-padded weight only)
            pl.BlockSpec((1, A), lambda i: (0, 0)),            # b2 (unpadded)
        ],
        out_specs=pl.BlockSpec((tile_b, A), lambda i: (i, 0)), # unpadded (B, A) output
        compiler_params=pltpu.CompilerParams(
            dimension_semantics=("parallel",)),                # shards batch tiles across v7x's 2 TCs
    )(state, w1c, b1r, w2c, b2r)


def qvalue_forward_ref(state, w1, b1, w2, b2):
    """Plain-JAX reference (and the recommended path for tiny per-step batches)."""
    return jnp.maximum(state @ w1 + b1, 0.0) @ w2 + b2


def qvalue_apply(state, w1, b1, w2, b2, *, small_batch_threshold=512, **kw):
    """Dispatcher: plain fused XLA dots for small batches, Pallas kernel otherwise."""
    if state.shape[0] < small_batch_threshold:
        return qvalue_forward_ref(state, w1, b1, w2, b2)
    return qvalue_forward(state, w1, b1, w2, b2, **kw)


def init_qvalue_params(key, state_size, action_size):
    """Deterministic init mimicking torch.nn.Linear default (uniform +/- 1/sqrt(fan_in))."""
    k1, k2, k3, k4 = jax.random.split(key, 4)
    bound1 = 1.0 / jnp.sqrt(state_size)
    bound2 = 1.0 / jnp.sqrt(HIDDEN)
    w1 = jax.random.uniform(k1, (state_size, HIDDEN), jnp.float32, -bound1, bound1)
    b1 = jax.random.uniform(k2, (HIDDEN,), jnp.float32, -bound1, bound1)
    w2 = jax.random.uniform(k3, (HIDDEN, action_size), jnp.float32, -bound2, bound2)
    b2 = jax.random.uniform(k4, (action_size,), jnp.float32, -bound2, bound2)
    return w1, b1, w2, b2


if __name__ == "__main__":
    key = jax.random.PRNGKey(0)
    k_state, k_params = jax.random.split(key)

    # Small batched-training-sized problem; tile_b=128 -> 2 grid steps so the
    # batch-tiled pipeline (and parallel semantics) is actually exercised.
    batch, state_size, action_size = 256, 32, 4
    state = jax.random.normal(k_state, (batch, state_size), jnp.float32)
    w1, b1, w2, b2 = init_qvalue_params(k_params, state_size, action_size)

    ref = qvalue_forward_ref(state, w1, b1, w2, b2)

    # f32 compute path: matches the PyTorch forward to tight tolerance.
    q = jax.block_until_ready(
        qvalue_forward(state, w1, b1, w2, b2, tile_b=128))
    assert q.shape == (batch, action_size)
    assert jnp.allclose(q, ref, atol=1e-5, rtol=1e-5)

    # Misaligned batch: exercises the partial last block (no jnp.pad copy of x).
    b_odd = 250
    q_odd = jax.block_until_ready(
        qvalue_forward(state[:b_odd], w1, b1, w2, b2, tile_b=128))
    assert q_odd.shape == (b_odd, action_size)
    assert jnp.allclose(q_odd, ref[:b_odd], atol=1e-5, rtol=1e-5)

    # bf16 MXU path (peak matmul dtype on v5e/v6e/v7x); activation cast happens
    # in-kernel, f32 accumulation keeps the error small.
    q_bf16 = jax.block_until_ready(
        qvalue_forward(state, w1, b1, w2, b2, tile_b=128,
                       compute_dtype=jnp.bfloat16))
    assert q_bf16.shape == (batch, action_size)
    assert jnp.allclose(q_bf16, ref, atol=5e-2, rtol=5e-2)

    # Default tile selection path (single call, auto tile / split heuristics).
    q_auto = jax.block_until_ready(qvalue_forward(state, w1, b1, w2, b2))
    assert jnp.allclose(q_auto, ref, atol=1e-5, rtol=1e-5)

    print("KERNEL_OK")
</pallas_src>

<mosaic_0001>
module attributes {stable_mosaic.version = 11 : i64} {
  func.func @_qvalue_kernel(%arg0: i32, %arg1: memref<128x32xf32, #tpu.memory_space<vmem>>, %arg2: memref<32x128xf32, #tpu.memory_space<vmem>>, %arg3: memref<1x128xf32, #tpu.memory_space<vmem>>, %arg4: memref<128x128xf32, #tpu.memory_space<vmem>>, %arg5: memref<1x4xf32, #tpu.memory_space<vmem>>, %arg6: memref<128x4xf32, #tpu.memory_space<vmem>>) attributes {dimension_semantics = [#tpu.dimension_semantics<parallel>], iteration_bounds = array<i64: 2>, scalar_prefetch = 0 : i64, scratch_operands = 0 : i64, tpu.core_type = #tpu.core_type<tc>, window_params = [{transform_indices = @transform_0, window_bounds = array<i64: 128, 32>}, {pipeline_mode = #tpu.pipeline_mode<synchronous>, transform_indices = @transform_1, window_bounds = array<i64: 32, 128>}, {pipeline_mode = #tpu.pipeline_mode<synchronous>, transform_indices = @transform_2, window_bounds = array<i64: 1, 128>}, {pipeline_mode = #tpu.pipeline_mode<synchronous>, transform_indices = @transform_3, window_bounds = array<i64: 128, 128>}, {pipeline_mode = #tpu.pipeline_mode<synchronous>, transform_indices = @transform_4, window_bounds = array<i64: 1, 4>}, {transform_indices = @transform_5, window_bounds = array<i64: 128, 4>}]} {
    %c0 = arith.constant 0 : index
    %c0_0 = arith.constant 0 : index
    %0 = vector.load %arg1[%c0, %c0_0] : memref<128x32xf32, #tpu.memory_space<vmem>>, vector<128x32xf32>
    %c0_1 = arith.constant 0 : index
    %c0_2 = arith.constant 0 : index
    %1 = vector.load %arg2[%c0_1, %c0_2] : memref<32x128xf32, #tpu.memory_space<vmem>>, vector<32x128xf32>
    %cst = arith.constant dense<0.000000e+00> : vector<128x128xf32>
    %2 = tpu.matmul %0, %1, %cst {dimension_numbers = #tpu.dot_dimension_numbers<[1], [0], [0], [1], [0, 0, 1, 1], [], []>} : vector<128x32xf32>, vector<32x128xf32>, vector<128x128xf32> -> vector<128x128xf32>
    %c0_3 = arith.constant 0 : index
    %c0_4 = arith.constant 0 : index
    %3 = vector.load %arg3[%c0_3, %c0_4] : memref<1x128xf32, #tpu.memory_space<vmem>>, vector<1x128xf32>
    %4 = vector.broadcast %3 : vector<1x128xf32> to vector<128x128xf32>
    %5 = arith.addf %2, %4 : vector<128x128xf32>
    %cst_5 = arith.constant 0.000000e+00 : f32
    %6 = vector.broadcast %cst_5 : f32 to vector<128x128xf32>
    %7 = arith.maximumf %5, %6 : vector<128x128xf32>
    %c0_6 = arith.constant 0 : index
    %c0_7 = arith.constant 0 : index
    %8 = vector.load %arg4[%c0_6, %c0_7] : memref<128x128xf32, #tpu.memory_space<vmem>>, vector<128x128xf32>
    %cst_8 = arith.constant dense<0.000000e+00> : vector<128x128xf32>
    %9 = tpu.matmul %7, %8, %cst_8 {dimension_numbers = #tpu.dot_dimension_numbers<[1], [0], [0], [1], [0, 0, 1, 1], [], []>} : vector<128x128xf32>, vector<128x128xf32>, vector<128x128xf32> -> vector<128x128xf32>
    %10 = vector.extract_strided_slice %9 {offsets = [0, 0], sizes = [128, 4], strides = [1, 1]} : vector<128x128xf32> to vector<128x4xf32>
    %c0_9 = arith.constant 0 : index
    %c0_10 = arith.constant 0 : index
    %11 = vector.load %arg5[%c0_9, %c0_10] : memref<1x4xf32, #tpu.memory_space<vmem>>, vector<1x4xf32>
    %12 = vector.broadcast %11 : vector<1x4xf32> to vector<128x4xf32>
    %13 = arith.addf %10, %12 : vector<128x4xf32>
    %c0_11 = arith.constant 0 : index
    %c0_12 = arith.constant 0 : index
    %14 = vector.load %arg6[%c0_11, %c0_12] : memref<128x4xf32, #tpu.memory_space<vmem>>, vector<128x4xf32>
    tpu.vector_store %arg6[%c0_11, %c0_12], %13 {strides = array<i32>} : memref<128x4xf32, #tpu.memory_space<vmem>>, vector<128x4xf32>,
    return
  }
  func.func @transform_0(%arg0: i32) -> (i32, i32) {
    %c0_i32 = arith.constant 0 : i32
    %c0_i32_0 = arith.constant 0 : i32
    return %arg0, %c0_i32 : i32, i32
  }
  func.func @transform_1(%arg0: i32) -> (i32, i32) {
    %c0_i32 = arith.constant 0 : i32
    %c0_i32_0 = arith.constant 0 : i32
    %c0_i32_1 = arith.constant 0 : i32
    return %c0_i32, %c0_i32_0 : i32, i32
  }
  func.func @transform_2(%arg0: i32) -> (i32, i32) {
    %c0_i32 = arith.constant 0 : i32
    %c0_i32_0 = arith.constant 0 : i32
    %c0_i32_1 = arith.constant 0 : i32
    return %c0_i32, %c0_i32_0 : i32, i32
  }
  func.func @transform_3(%arg0: i32) -> (i32, i32) {
    %c0_i32 = arith.constant 0 : i32
    %c0_i32_0 = arith.constant 0 : i32
    %c0_i32_1 = arith.constant 0 : i32
    return %c0_i32, %c0_i32_0 : i32, i32
  }
  func.func @transform_4(%arg0: i32) -> (i32, i32) {
    %c0_i32 = arith.constant 0 : i32
    %c0_i32_0 = arith.constant 0 : i32
    %c0_i32_1 = arith.constant 0 : i32
    return %c0_i32, %c0_i32_0 : i32, i32
  }
  func.func @transform_5(%arg0: i32) -> (i32, i32) {
    %c0_i32 = arith.constant 0 : i32
    %c0_i32_0 = arith.constant 0 : i32
    return %arg0, %c0_i32 : i32, i32
  }
}

</mosaic_0001>

<llo_original>
// kernel: tpu_custom_call.1
$region0: #{tpu_custom_call.1}
  #allocation0 [shape = 'u32[]', space=smem, size = 0x4, offset = 0x4, fixed_abs, tag = 'smem constant byte address 0x4 - core index']
  #allocation1 [shape = 'u32[144,128]{1,0:T(1,128)}', space=vmem, size = 0x12000, scoped, tag = 'internal scratch']
  %s0 = inlined_call_operand.vmem [shape: f32[256,32], index: 0, kind: input, shape index: {}]
  %s1 = inlined_call_operand.vmem [shape: f32[32,128], index: 1, kind: input, shape index: {}]
  %s2 = inlined_call_operand.vmem [shape: f32[1,128], index: 2, kind: input, shape index: {}]
  %s3 = inlined_call_operand.vmem [shape: f32[128,128], index: 3, kind: input, shape index: {}]
  %s4 = inlined_call_operand.vmem [shape: f32[1,4], index: 4, kind: input, shape index: {}]
  %s5 = inlined_call_operand.vmem [shape: f32[256,4], index: 5, kind: output, shape index: {}]
  %s6 = sld [smem:[#allocation0]]
  $region53: #{tpu_custom_call.1} parent=0
    _
  %s8 = ssub.s32 1, %s6
  %s9 = scalar_select 0, %s8, %s6
  loop: start=0, step=1, limit=4
  $region2: #{tpu_custom_call.1} parent=0 // loop_pre_header
    _
  $region3: #{tpu_custom_call.1} parent=0 // loop_header
    %s11 = sphi 0, %s15
    %p12 = scmp.ge.s32.totalorder %s11, 4
    %s21 = sphi 0, %s23
    %s24 = sphi 0, %s21
    %s25 = sphi 0, %s24
    %s41 = sphi 0, %s25
    %s45 = sphi 0, %s45
    %s47 = sphi 0, %s45
    %s48 = sphi 0, %s47
    %s62 = sphi 0, %s48
    %s66 = sphi 0, %s66
    %s68 = sphi 0, %s66
    %s69 = sphi 0, %s68
    %s83 = sphi 0, %s69
    %s87 = sphi 0, %s87
    %s89 = sphi 0, %s87
    %s90 = sphi 0, %s89
    %s104 = sphi 0, %s90
    %s108 = sphi 0, %s108
    %s110 = sphi 0, %s108
    %s111 = sphi 0, %s110
    %s125 = sphi 0, %s111
    %s131 = sphi 0, %s133
    %s134 = sphi 0, %s131
    %s135 = sphi 0, %s134
    %s151 = sphi 0, %s135
  $region4: #{tpu_custom_call.1} parent=0 // loop_header_branch
    %14 = sbr.rel (%p12) target = $region8
  $region5: #{tpu_custom_call.1} parent=0 // loop_body
    %s16 = ssub.s32 %s11, 1
    %s17 = ssub.s32 %s11, 2
    %s18 = sadd.s32 %s11, 1
    %s19 = ssub.s32 %s11, %s18
    %p20 = scmp.eq.s32.totalorder %s19, 0
    %s22 = sadd.s32 %s21, 1
    %s23 = scalar_select %p20, %s21, %s22
    %p26 = pneg %p20
    %p27 = scmp.eq.s32.totalorder %s11, 1
    %p28 = por %p26, %p27
    %p29 = scmp.ne.s32.totalorder %s21, %s24
    %p30 = scmp.eq.s32.totalorder %s11, 0
    %p31 = por %p29, %p30
    %p32 = scmp.ne.s32.totalorder %s21, %s24
    %p33 = scmp.eq.s32.totalorder %s16, 1
    %p34 = por %p32, %p33
    %p35 = scmp.ne.s32.totalorder %s24, %s25
    %p36 = scmp.eq.s32.totalorder %s16, 0
    %p37 = por %p35, %p36
    %p38 = scmp.ne.s32.totalorder %s24, %s25
    %p39 = scmp.eq.s32.totalorder %s17, 1
    %p40 = por %p38, %p39
    %p42 = scmp.ne.s32.totalorder %s25, %s41
    %p43 = scmp.eq.s32.totalorder %s17, 0
    %p44 = por %p42, %p43
    %s46 = sadd.s32 %s45, 1
    %p49 = scmp.eq.s32.totalorder %s11, 1
    %p50 = scmp.ne.s32.totalorder %s45, %s47
    %p51 = scmp.eq.s32.totalorder %s11, 0
    %p52 = por %p50, %p51
    %p53 = scmp.ne.s32.totalorder %s45, %s47
    %p54 = scmp.eq.s32.totalorder %s16, 1
    %p55 = por %p53, %p54
    %p56 = scmp.ne.s32.totalorder %s47, %s48
    %p57 = scmp.eq.s32.totalorder %s16, 0
    %p58 = por %p56, %p57
    %p59 = scmp.ne.s32.totalorder %s47, %s48
    %p60 = scmp.eq.s32.totalorder %s17, 1
    %p61 = por %p59, %p60
    %p63 = scmp.ne.s32.totalorder %s48, %s62
    %p64 = scmp.eq.s32.totalorder %s17, 0
    %p65 = por %p63, %p64
    %s67 = sadd.s32 %s66, 1
    %p70 = scmp.eq.s32.totalorder %s11, 1
    %p71 = scmp.ne.s32.totalorder %s66, %s68
    %p72 = scmp.eq.s32.totalorder %s11, 0
    %p73 = por %p71, %p72
    %p74 = scmp.ne.s32.totalorder %s66, %s68
    %p75 = scmp.eq.s32.totalorder %s16, 1
    %p76 = por %p74, %p75
    %p77 = scmp.ne.s32.totalorder %s68, %s69
    %p78 = scmp.eq.s32.totalorder %s16, 0
    %p79 = por %p77, %p78
    %p80 = scmp.ne.s32.totalorder %s68, %s69
    %p81 = scmp.eq.s32.totalorder %s17, 1
    %p82 = por %p80, %p81
    %p84 = scmp.ne.s32.totalorder %s69, %s83
    %p85 = scmp.eq.s32.totalorder %s17, 0
    %p86 = por %p84, %p85
    %s88 = sadd.s32 %s87, 1
    %p91 = scmp.eq.s32.totalorder %s11, 1
    %p92 = scmp.ne.s32.totalorder %s87, %s89
    %p93 = scmp.eq.s32.totalorder %s11, 0
    %p94 = por %p92, %p93
    %p95 = scmp.ne.s32.totalorder %s87, %s89
    %p96 = scmp.eq.s32.totalorder %s16, 1
    %p97 = por %p95, %p96
    %p98 = scmp.ne.s32.totalorder %s89, %s90
    %p99 = scmp.eq.s32.totalorder %s16, 0
    %p100 = por %p98, %p99
    %p101 = scmp.ne.s32.totalorder %s89, %s90
    %p102 = scmp.eq.s32.totalorder %s17, 1
    %p103 = por %p101, %p102
    %p105 = scmp.ne.s32.totalorder %s90, %s104
    %p106 = scmp.eq.s32.totalorder %s17, 0
    %p107 = por %p105, %p106
    %s109 = sadd.s32 %s108, 1
    %p112 = scmp.eq.s32.totalorder %s11, 1
    %p113 = scmp.ne.s32.totalorder %s108, %s110
    %p114 = scmp.eq.s32.totalorder %s11, 0
    %p115 = por %p113, %p114
    %p116 = scmp.ne.s32.totalorder %s108, %s110
    %p117 = scmp.eq.s32.totalorder %s16, 1
    %p118 = por %p116, %p117
    %p119 = scmp.ne.s32.totalorder %s110, %s111
    %p120 = scmp.eq.s32.totalorder %s16, 0
    %p121 = por %p119, %p120
    %p122 = scmp.ne.s32.totalorder %s110, %s111
    %p123 = scmp.eq.s32.totalorder %s17, 1
    %p124 = por %p122, %p123
    %p126 = scmp.ne.s32.totalorder %s111, %s125
    %p127 = scmp.eq.s32.totalorder %s17, 0
    %p128 = por %p126, %p127
    %s129 = ssub.s32 %s11, %s18
    %p130 = scmp.eq.s32.totalorder %s129, 0
    %s132 = sadd.s32 %s131, 1
    %s133 = scalar_select %p130, %s131, %s132
    %p136 = pneg %p130
    %p137 = scmp.eq.s32.totalorder %s11, 1
    %p138 = por %p136, %p137
    %p139 = scmp.ne.s32.totalorder %s131, %s134
    %p140 = scmp.eq.s32.totalorder %s11, 0
    %p141 = por %p139, %p140
    %p142 = scmp.ne.s32.totalorder %s131, %s134
    %p143 = scmp.eq.s32.totalorder %s16, 1
    %p144 = por %p142, %p143
    %p145 = scmp.ne.s32.totalorder %s134, %s135
    %p146 = scmp.eq.s32.totalorder %s16, 0
    %p147 = por %p145, %p146
    %p148 = scmp.ne.s32.totalorder %s134, %s135
    %p149 = scmp.eq.s32.totalorder %s17, 1
    %p150 = por %p148, %p149
    %p152 = scmp.ne.s32.totalorder %s135, %s151
    %p153 = scmp.eq.s32.totalorder %s17, 0
    %p154 = por %p152, %p153
    %p155 = scmp.le.s32.totalorder 1, %s11
    %p156 = scmp.lt.s32.totalorder %s11, 3
    %p157 = pnand %p155, %p156
    %p158 = pneg %p157
    // Predicated region
    $region9: #{tpu_custom_call.1} parent=5 // pred_check
      _
    $region10: #{tpu_custom_call.1} parent=5 // pred_check_branch
      %160 = sbr.rel (%p157) target = $region12
    $region11: #{tpu_custom_call.1} parent=5 // pred_region
      %s161 = ssub.s32 %s11, 1
      // Predicated region
      $region13: #{tpu_custom_call.1} parent=11 // pred_check
        %p162 = pneg %p58
      $region14: #{tpu_custom_call.1} parent=11 // pred_check_branch
        %164 = sbr.rel (%p162) target = $region16
      $region15: #{tpu_custom_call.1} parent=11 // pred_region
        _
      $region16: #{tpu_custom_call.1} parent=11 // pred_fallthru
        _
      // Predicated region
      $region17: #{tpu_custom_call.1} parent=11 // pred_check
        %p165 = pneg %p79
      $region18: #{tpu_custom_call.1} parent=11 // pred_check_branch
        %167 = sbr.rel (%p165) target = $region20
      $region19: #{tpu_custom_call.1} parent=11 // pred_region
        _
      $region20: #{tpu_custom_call.1} parent=11 // pred_fallthru
        _
      // Predicated region
      $region21: #{tpu_custom_call.1} parent=11 // pred_check
        %p168 = pneg %p100
      $region22: #{tpu_custom_call.1} parent=11 // pred_check_branch
        %170 = sbr.rel (%p168) target = $region24
      $region23: #{tpu_custom_call.1} parent=11 // pred_region
        _
      $region24: #{tpu_custom_call.1} parent=11 // pred_fallthru
        _
      // Predicated region
      $region25: #{tpu_custom_call.1} parent=11 // pred_check
        %p171 = pneg %p121
      $region26: #{tpu_custom_call.1} parent=11 // pred_check_branch
        %173 = sbr.rel (%p171) target = $region28
      $region27: #{tpu_custom_call.1} parent=11 // pred_region
        _
      $region28: #{tpu_custom_call.1} parent=11 // pred_fallthru
        _
    $region12: #{tpu_custom_call.1} parent=5 // pred_fallthru
      _
    %p174 = scmp.lt.s32.totalorder %s11, 2
    // Predicated region
    $region29: #{tpu_custom_call.1} parent=5 // pred_check
      %p175 = pneg %p174
    $region30: #{tpu_custom_call.1} parent=5 // pred_check_branch
      %177 = sbr.rel (%p175) target = $region32
    $region31: #{tpu_custom_call.1} parent=5 // pred_region
      // Predicated region
      $region33: #{tpu_custom_call.1} parent=31 // pred_check
        %p178 = pneg %p31
      $region34: #{tpu_custom_call.1} parent=31 // pred_check_branch
        %180 = sbr.rel (%p178) target = $region36
      $region35: #{tpu_custom_call.1} parent=31 // pred_region
        %s181 = smul.u32 16, %s11
        %p182 = scmp.lt.s32.totalorder %s181, 31
        %s183 = scalar_select %p182, %s181, 31
        %s184 = smul.addr %s183, 8
        %s185 = scalar_lea.vmem %s0, %s184
        %s186 = smul.u32 16, %s11
      $region36: #{tpu_custom_call.1} parent=31 // pred_fallthru
        _
    $region32: #{tpu_custom_call.1} parent=5 // pred_fallthru
      _
    %p187 = scmp.le.s32.totalorder 1, %s11
    %p188 = scmp.lt.s32.totalorder %s11, 3
    %p189 = pnand %p187, %p188
    %p190 = pneg %p189
    // Predicated region
    $region37: #{tpu_custom_call.1} parent=5 // pred_check
      _
    $region38: #{tpu_custom_call.1} parent=5 // pred_check_branch
      %192 = sbr.rel (%p189) target = $region40
    $region39: #{tpu_custom_call.1} parent=5 // pred_region
      %s193 = ssub.s32 %s11, 1
      %s194 = smul.u32 16, %s16
      %p195 = scmp.lt.s32.totalorder %s194, 31
      %s196 = scalar_select %p195, %s194, 31
      %s197 = smul.addr %s196, 8
      %s198 = scalar_lea.vmem %s0, %s197
      %p199 = pneg %p37
      %p200 = pneg %p34
      %p201 = pneg %p58
      %p202 = pneg %p55
      %p203 = pneg %p79
      %p204 = pneg %p76
      %p205 = pneg %p100
      %p206 = pneg %p97
      %p207 = pneg %p121
      %p208 = pneg %p118
      %p209 = pneg %p147
      %p210 = pneg %p144
      %s211 = smul.u32 16, %s16
      %p212 = scmp.lt.s32.totalorder %s211, 31
      %s213 = scalar_select %p212, %s211, 31
      %s214 = smul.addr %s213, 8
      %s215 = scalar_lea.vmem %s5, %s214
      %s216 = smul.u32 16, %s16
      %p217 = scmp.lt.s32.totalorder %s216, 31
      %s218 = scalar_select %p217, %s216, 31
      %s219 = smul.addr %s218, 8
      %s220 = scalar_lea.vmem %s0, %s219
      %s221 = smul.u32 16, %s16
      %s222 = smul.u32 16, %s16
      %p223 = scmp.lt.s32.totalorder %s222, 31
      %s224 = scalar_select %p223, %s222, 31
      %s225 = smul.addr %s224, 8
      %s226 = scalar_lea.vmem %s5, %s225
      %s227 = smul.u32 16, %s16
      %v228 = vld [vmem:[%s220] sm:$0xff]
      %v229 = vld [vmem:[%s220 + $0x8] sm:$0xff]
      %v230 = vld [vmem:[%s220 + $0x10] sm:$0xff]
      %v231 = vld [vmem:[%s220 + $0x18] sm:$0xff]
      %v232 = vld [vmem:[%s220 + $0x20] sm:$0xff]
      %v233 = vld [vmem:[%s220 + $0x28] sm:$0xff]
      %v234 = vld [vmem:[%s220 + $0x30] sm:$0xff]
      %v235 = vld [vmem:[%s220 + $0x38] sm:$0xff]
      %v236 = vld [vmem:[%s220 + $0x40] sm:$0xff]
      %v237 = vld [vmem:[%s220 + $0x48] sm:$0xff]
      %v238 = vld [vmem:[%s220 + $0x50] sm:$0xff]
      %v239 = vld [vmem:[%s220 + $0x58] sm:$0xff]
      %v240 = vld [vmem:[%s220 + $0x60] sm:$0xff]
      %v241 = vld [vmem:[%s220 + $0x68] sm:$0xff]
      %v242 = vld [vmem:[%s220 + $0x70] sm:$0xff]
      %v243 = vld [vmem:[%s220 + $0x78] sm:$0xff]
      %v244 = vld [vmem:[%s1] sm:$0xff]
      %v245 = vld [vmem:[%s1 + $0x8] sm:$0xff]
      %v246 = vld [vmem:[%s1 + $0x10] sm:$0xff]
      %v247 = vld [vmem:[%s1 + $0x18] sm:$0xff]
      %v248 = vld [vmem:[%s2] sm:$0x1]
      %v250 = vlaneseq
      %v251 = vshrl.u32 %v250, 7
      %v252 = vsub.s32 0, %v251
      %v253 = vrot.slane %v248, %v252
      %vm255 = vcmask 261120
      %v257 = vsel %vm255, %v228, 0
      %v260 = vsel %vm255, %v229, 0
      %v263 = vsel %vm255, %v230, 0
      %v266 = vsel %vm255, %v231, 0
      %v269 = vsel %vm255, %v232, 0
      %v272 = vsel %vm255, %v233, 0
      %v275 = vsel %vm255, %v234, 0
      %v278 = vsel %vm255, %v235, 0
      %v281 = vsel %vm255, %v236, 0
      %v284 = vsel %vm255, %v237, 0
      %v287 = vsel %vm255, %v238, 0
      %v290 = vsel %vm255, %v239, 0
      %v293 = vsel %vm255, %v240, 0
      %v296 = vsel %vm255, %v241, 0
      %v299 = vsel %vm255, %v242, 0
      %v302 = vsel %vm255, %v243, 0
      %304 = vmatprep.subr.mxu0 0.0
      %305 = vmatpush1.msra.mxu0 %v244
      %306 = vmatprep.subr.mxu0 0.0
      %307 = vmatpush1.msra.mxu0 %v245
      %308 = vmatprep.subr.mxu0 0.0
      %309 = vmatpush1.msra.mxu0 %v246
      %310 = vmatprep.subr.mxu0 0.0
      %311 = vmatpush1.msra.mxu0 %v247
      %312 = vmatprep.subr.mxu0 0.0
      %313 = vmatpush1.msra.mxu0 0.0
      %314 = vmatprep.subr.mxu0 0.0
      %315 = vmatpush1.msra.mxu0 0.0
      %316 = vmatprep.subr.mxu0 0.0
      %317 = vmatpush1.msra.mxu0 0.0
      %318 = vmatprep.subr.mxu0 0.0
      %319 = vmatpush1.msra.mxu0 0.0
      %320 = vmatprep.subr.mxu0 0.0
      %321 = vmatpush1.msra.mxu0 0.0
      %322 = vmatprep.subr.mxu0 0.0
      %323 = vmatpush1.msra.mxu0 0.0
      %324 = vmatprep.subr.mxu0 0.0
      %325 = vmatpush1.msra.mxu0 0.0
      %326 = vmatprep.subr.mxu0 0.0
      %327 = vmatpush1.msra.mxu0 0.0
      %328 = vmatprep.subr.mxu0 0.0
      %329 = vmatpush1.msra.mxu0 0.0
      %330 = vmatprep.subr.mxu0 0.0
      %331 = vmatpush1.msra.mxu0 0.0
      %332 = vmatprep.subr.mxu0 0.0
      %333 = vmatpush1.msra.mxu0 0.0
      %334 = vmatprep.subr.mxu0 0.0
      %335 = vmatpush1.msra.mxu0 0.0
      %336 = vmatprep.subr.mxu0 0.0
      %337 = vmatpush1.msra.mxu0 0.0
      %338 = vmatprep.subr.mxu0 0.0
      %339 = vmatpush1.msra.mxu0 0.0
      %340 = vmatprep.subr.mxu0 0.0
      %341 = vmatpush1.msra.mxu0 0.0
      %342 = vmatprep.subr.mxu0 0.0
      %343 = vmatpush1.msra.mxu0 0.0
      %344 = vmatprep.subr.mxu0 0.0
      %345 = vmatpush1.msra.mxu0 0.0
      %346 = vmatprep.subr.mxu0 0.0
      %347 = vmatpush1.msra.mxu0 0.0
      %348 = vmatprep.subr.mxu0 0.0
      %349 = vmatpush1.msra.mxu0 0.0
      %350 = vmatprep.subr.mxu0 0.0
      %351 = vmatpush1.msra.mxu0 0.0
      %352 = vmatprep.subr.mxu0 0.0
      %353 = vmatpush1.msra.mxu0 0.0
      %354 = vmatprep.subr.mxu0 0.0
      %355 = vmatpush1.msra.mxu0 0.0
      %356 = vmatprep.subr.mxu0 0.0
      %357 = vmatpush1.msra.mxu0 0.0
      %358 = vmatprep.subr.mxu0 0.0
      %359 = vmatpush1.msra.mxu0 0.0
      %360 = vmatprep.subr.mxu0 0.0
      %361 = vmatpush1.msra.mxu0 0.0
      %362 = vmatprep.subr.mxu0 0.0
      %363 = vmatpush1.msra.mxu0 0.0
      %364 = vmatprep.subr.mxu0 0.0
      %365 = vmatpush1.msra.mxu0 0.0
      %366 = vmatprep.subr.mxu0 0.0
      %367 = vmatpush1.msra.mxu0 0.0
      %368 = vmatprep.mubr.f32.mxu0 0.0
      %369 = vmatmul.mubr.f32.gmra.mrb[0].mxu0 %v257
      %v370 = vpop.f32.mrb[0].mxu0
      %v371 = vadd.f32 %v253, %v370
      %v372 = vpop.f32.mrb[0].mxu0
      %373 = vmatprep.mubr.f32.mxu0 0.0
      %374 = vmatmul.mubr.f32.gmra.mrb[0].mxu0 %v260
      %v375 = vpop.f32.mrb[0].mxu0
      %v376 = vadd.f32 %v253, %v375
      %v377 = vpop.f32.mrb[0].mxu0
      %378 = vmatprep.mubr.f32.mxu0 0.0
      %379 = vmatmul.mubr.f32.gmra.mrb[0].mxu0 %v263
      %v380 = vpop.f32.mrb[0].mxu0
      %v381 = vadd.f32 %v253, %v380
      %v382 = vpop.f32.mrb[0].mxu0
      %383 = vmatprep.mubr.f32.mxu0 0.0
      %384 = vmatmul.mubr.f32.gmra.mrb[0].mxu0 %v266
      %v385 = vpop.f32.mrb[0].mxu0
      %v386 = vadd.f32 %v253, %v385
      %v387 = vpop.f32.mrb[0].mxu0
      %388 = vmatprep.mubr.f32.mxu0 0.0
      %389 = vmatmul.mubr.f32.gmra.mrb[0].mxu0 %v269
      %v390 = vpop.f32.mrb[0].mxu0
      %v391 = vadd.f32 %v253, %v390
      %v392 = vpop.f32.mrb[0].mxu0
      %393 = vmatprep.mubr.f32.mxu0 0.0
      %394 = vmatmul.mubr.f32.gmra.mrb[0].mxu0 %v272
      %v395 = vpop.f32.mrb[0].mxu0
      %v396 = vadd.f32 %v253, %v395
      %v397 = vpop.f32.mrb[0].mxu0
      %398 = vmatprep.mubr.f32.mxu0 0.0
      %399 = vmatmul.mubr.f32.gmra.mrb[0].mxu0 %v275
      %v400 = vpop.f32.mrb[0].mxu0
      %v401 = vadd.f32 %v253, %v400
      %v402 = vpop.f32.mrb[0].mxu0
      %403 = vmatprep.mubr.f32.mxu0 0.0
      %404 = vmatmul.mubr.f32.gmra.mrb[0].mxu0 %v278
      %v405 = vpop.f32.mrb[0].mxu0
      %v406 = vadd.f32 %v253, %v405
      %v407 = vpop.f32.mrb[0].mxu0
      %408 = vmatprep.mubr.f32.mxu0 0.0
      %409 = vmatmul.mubr.f32.gmra.mrb[0].mxu0 %v281
      %v410 = vpop.f32.mrb[0].mxu0
      %v411 = vadd.f32 %v253, %v410
      %v412 = vpop.f32.mrb[0].mxu0
      %413 = vmatprep.mubr.f32.mxu0 0.0
      %414 = vmatmul.mubr.f32.gmra.mrb[0].mxu0 %v284
      %v415 = vpop.f32.mrb[0].mxu0
      %v416 = vadd.f32 %v253, %v415
      %v417 = vpop.f32.mrb[0].mxu0
      %418 = vmatprep.mubr.f32.mxu0 0.0
      %419 = vmatmul.mubr.f32.gmra.mrb[0].mxu0 %v287
      %v420 = vpop.f32.mrb[0].mxu0
      %v421 = vadd.f32 %v253, %v420
      %v422 = vpop.f32.mrb[0].mxu0
      %423 = vmatprep.mubr.f32.mxu0 0.0
      %424 = vmatmul.mubr.f32.gmra.mrb[0].mxu0 %v290
      %v425 = vpop.f32.mrb[0].mxu0
      %v426 = vadd.f32 %v253, %v425
      %v427 = vpop.f32.mrb[0].mxu0
      %428 = vmatprep.mubr.f32.mxu0 0.0
      %429 = vmatmul.mubr.f32.gmra.mrb[0].mxu0 %v293
      %v430 = vpop.f32.mrb[0].mxu0
      %v431 = vadd.f32 %v253, %v430
      %v432 = vpop.f32.mrb[0].mxu0
      %433 = vmatprep.mubr.f32.mxu0 0.0
      %434 = vmatmul.mubr.f32.gmra.mrb[0].mxu0 %v296
      %v435 = vpop.f32.mrb[0].mxu0
      %v436 = vadd.f32 %v253, %v435
      %v437 = vpop.f32.mrb[0].mxu0
      %438 = vmatprep.mubr.f32.mxu0 0.0
      %439 = vmatmul.mubr.f32.gmra.mrb[0].mxu0 %v299
      %v440 = vpop.f32.mrb[0].mxu0
      %v441 = vadd.f32 %v253, %v440
      %v442 = vpop.f32.mrb[0].mxu0
      %443 = vmatprep.mubr.f32.mxu0 0.0
      %444 = vmatmul.mubr.f32.gmra.mrb[0].mxu0 %v302
      %v445 = vpop.f32.mrb[0].mxu0
      %v446 = vadd.f32 %v253, %v445
      %v447 = vpop.f32.mrb[0].mxu0
      %448 = vdwg.mxu0
      %v449 = vmax.f32 %v371, 0.0
      %v450 = vmax.f32 %v376, 0.0
      %v451 = vmax.f32 %v381, 0.0
      %v452 = vmax.f32 %v386, 0.0
      %v453 = vmax.f32 %v391, 0.0
      %v454 = vmax.f32 %v396, 0.0
      %v455 = vmax.f32 %v401, 0.0
      %v456 = vmax.f32 %v406, 0.0
      %v457 = vmax.f32 %v411, 0.0
      %v458 = vmax.f32 %v416, 0.0
      %v459 = vmax.f32 %v421, 0.0
      %v460 = vmax.f32 %v426, 0.0
      %v461 = vmax.f32 %v431, 0.0
      %v462 = vmax.f32 %v436, 0.0
      %v463 = vmax.f32 %v441, 0.0
      %v464 = vmax.f32 %v446, 0.0
      %v465 = vld [vmem:[%s3] sm:$0xff]
      %v466 = vld [vmem:[%s3 + $0x8] sm:$0xff]
      %v467 = vld [vmem:[%s3 + $0x10] sm:$0xff]
      %v468 = vld [vmem:[%s3 + $0x18] sm:$0xff]
      %v469 = vld [vmem:[%s3 + $0x20] sm:$0xff]
      %v470 = vld [vmem:[%s3 + $0x28] sm:$0xff]
      %v471 = vld [vmem:[%s3 + $0x30] sm:$0xff]
      %v472 = vld [vmem:[%s3 + $0x38] sm:$0xff]
      %v473 = vld [vmem:[%s3 + $0x40] sm:$0xff]
      %v474 = vld [vmem:[%s3 + $0x48] sm:$0xff]
      %v475 = vld [vmem:[%s3 + $0x50] sm:$0xff]
      %v476 = vld [vmem:[%s3 + $0x58] sm:$0xff]
      %v477 = vld [vmem:[%s3 + $0x60] sm:$0xff]
      %v478 = vld [vmem:[%s3 + $0x68] sm:$0xff]
      %v479 = vld [vmem:[%s3 + $0x70] sm:$0xff]
      %v480 = vld [vmem:[%s3 + $0x78] sm:$0xff]
      %481 = vmatprep.subr.mxu0 0.0
      %482 = vmatpush1.msra.mxu0 %v465
      %483 = vmatprep.subr.mxu0 0.0
      %484 = vmatpush1.msra.mxu0 %v466
      %485 = vmatprep.subr.mxu0 0.0
      %486 = vmatpush1.msra.mxu0 %v467
      %487 = vmatprep.subr.mxu0 0.0
      %488 = vmatpush1.msra.mxu0 %v468
      %489 = vmatprep.subr.mxu0 0.0
      %490 = vmatpush1.msra.mxu0 %v469
      %491 = vmatprep.subr.mxu0 0.0
      %492 = vmatpush1.msra.mxu0 %v470
      %493 = vmatprep.subr.mxu0 0.0
      %494 = vmatpush1.msra.mxu0 %v471
      %495 = vmatprep.subr.mxu0 0.0
      %496 = vmatpush1.msra.mxu0 %v472
      %497 = vmatprep.subr.mxu0 0.0
      %498 = vmatpush1.msra.mxu0 %v473
      %499 = vmatprep.subr.mxu0 0.0
      %500 = vmatpush1.msra.mxu0 %v474
      %501 = vmatprep.subr.mxu0 0.0
      %502 = vmatpush1.msra.mxu0 %v475
      %503 = vmatprep.subr.mxu0 0.0
      %504 = vmatpush1.msra.mxu0 %v476
      %505 = vmatprep.subr.mxu0 0.0
      %506 = vmatpush1.msra.mxu0 %v477
      %507 = vmatprep.subr.mxu0 0.0
      %508 = vmatpush1.msra.mxu0 %v478
      %509 = vmatprep.subr.mxu0 0.0
      %510 = vmatpush1.msra.mxu0 %v479
      %511 = vmatprep.subr.mxu0 0.0
      %512 = vmatpush1.msra.mxu0 %v480
      %513 = vmatprep.subr.mxu0 0.0
      %514 = vmatpush1.msra.mxu0 0.0
      %515 = vmatprep.subr.mxu0 0.0
      %516 = vmatpush1.msra.mxu0 0.0
      %517 = vmatprep.subr.mxu0 0.0
      %518 = vmatpush1.msra.mxu0 0.0
      %519 = vmatprep.subr.mxu0 0.0
      %520 = vmatpush1.msra.mxu0 0.0
      %521 = vmatprep.subr.mxu0 0.0
      %522 = vmatpush1.msra.mxu0 0.0
      %523 = vmatprep.subr.mxu0 0.0
      %524 = vmatpush1.msra.mxu0 0.0
      %525 = vmatprep.subr.mxu0 0.0
      %526 = vmatpush1.msra.mxu0 0.0
      %527 = vmatprep.subr.mxu0 0.0
      %528 = vmatpush1.msra.mxu0 0.0
      %529 = vmatprep.subr.mxu0 0.0
      %530 = vmatpush1.msra.mxu0 0.0
      %531 = vmatprep.subr.mxu0 0.0
      %532 = vmatpush1.msra.mxu0 0.0
      %533 = vmatprep.subr.mxu0 0.0
      %534 = vmatpush1.msra.mxu0 0.0
      %535 = vmatprep.subr.mxu0 0.0
      %536 = vmatpush1.msra.mxu0 0.0
      %537 = vmatprep.subr.mxu0 0.0
      %538 = vmatpush1.msra.mxu0 0.0
      %539 = vmatprep.subr.mxu0 0.0
      %540 = vmatpush1.msra.mxu0 0.0
      %541 = vmatprep.subr.mxu0 0.0
      %542 = vmatpush1.msra.mxu0 0.0
      %543 = vmatprep.subr.mxu0 0.0
      %544 = vmatpush1.msra.mxu0 0.0
      %545 = vmatprep.mubr.f32.mxu0 0.0
      %546 = vmatmul.mubr.f32.gmra.mrb[0].mxu0 %v449
      %v547 = vpop.f32.mrb[0].mxu0
      %v548 = vadd.f32 0.0, %v547
      %v549 = vpop.f32.mrb[0].mxu0
      %550 = vmatprep.mubr.f32.mxu0 0.0
      %551 = vmatmul.mubr.f32.gmra.mrb[0].mxu0 %v450
      %v552 = vpop.f32.mrb[0].mxu0
      %v553 = vadd.f32 0.0, %v552
      %v554 = vpop.f32.mrb[0].mxu0
      %555 = vmatprep.mubr.f32.mxu0 0.0
      %556 = vmatmul.mubr.f32.gmra.mrb[0].mxu0 %v451
      %v557 = vpop.f32.mrb[0].mxu0
      %v558 = vadd.f32 0.0, %v557
      %v559 = vpop.f32.mrb[0].mxu0
      %560 = vmatprep.mubr.f32.mxu0 0.0
      %561 = vmatmul.mubr.f32.gmra.mrb[0].mxu0 %v452
      %v562 = vpop.f32.mrb[0].mxu0
      %v563 = vadd.f32 0.0, %v562
      %v564 = vpop.f32.mrb[0].mxu0
      %565 = vmatprep.mubr.f32.mxu0 0.0
      %566 = vmatmul.mubr.f32.gmra.mrb[0].mxu0 %v453
      %v567 = vpop.f32.mrb[0].mxu0
      %v568 = vadd.f32 0.0, %v567
      %v569 = vpop.f32.mrb[0].mxu0
      %570 = vmatprep.mubr.f32.mxu0 0.0
      %571 = vmatmul.mubr.f32.gmra.mrb[0].mxu0 %v454
      %v572 = vpop.f32.mrb[0].mxu0
      %v573 = vadd.f32 0.0, %v572
      %v574 = vpop.f32.mrb[0].mxu0
      %575 = vmatprep.mubr.f32.mxu0 0.0
      %576 = vmatmul.mubr.f32.gmra.mrb[0].mxu0 %v455
      %v577 = vpop.f32.mrb[0].mxu0
      %v578 = vadd.f32 0.0, %v577
      %v579 = vpop.f32.mrb[0].mxu0
      %580 = vmatprep.mubr.f32.mxu0 0.0
      %581 = vmatmul.mubr.f32.gmra.mrb[0].mxu0 %v456
      %v582 = vpop.f32.mrb[0].mxu0
      %v583 = vadd.f32 0.0, %v582
      %v584 = vpop.f32.mrb[0].mxu0
      %585 = vmatprep.mubr.f32.mxu0 0.0
      %586 = vmatmul.mubr.f32.gmra.mrb[0].mxu0 %v457
      %v587 = vpop.f32.mrb[0].mxu0
      %v588 = vadd.f32 0.0, %v587
      %v589 = vpop.f32.mrb[0].mxu0
      %590 = vmatprep.mubr.f32.mxu0 0.0
      %591 = vmatmul.mubr.f32.gmra.mrb[0].mxu0 %v458
      %v592 = vpop.f32.mrb[0].mxu0
      %v593 = vadd.f32 0.0, %v592
      %v594 = vpop.f32.mrb[0].mxu0
      %595 = vmatprep.mubr.f32.mxu0 0.0
      %596 = vmatmul.mubr.f32.gmra.mrb[0].mxu0 %v459
      %v597 = vpop.f32.mrb[0].mxu0
      %v598 = vadd.f32 0.0, %v597
      %v599 = vpop.f32.mrb[0].mxu0
      %600 = vmatprep.mubr.f32.mxu0 0.0
      %601 = vmatmul.mubr.f32.gmra.mrb[0].mxu0 %v460
      %v602 = vpop.f32.mrb[0].mxu0
      %v603 = vadd.f32 0.0, %v602
      %v604 = vpop.f32.mrb[0].mxu0
      %605 = vmatprep.mubr.f32.mxu0 0.0
      %606 = vmatmul.mubr.f32.gmra.mrb[0].mxu0 %v461
      %v607 = vpop.f32.mrb[0].mxu0
      %v608 = vadd.f32 0.0, %v607
      %v609 = vpop.f32.mrb[0].mxu0
      %610 = vmatprep.mubr.f32.mxu0 0.0
      %611 = vmatmul.mubr.f32.gmra.mrb[0].mxu0 %v462
      %v612 = vpop.f32.mrb[0].mxu0
      %v613 = vadd.f32 0.0, %v612
      %v614 = vpop.f32.mrb[0].mxu0
      %615 = vmatprep.mubr.f32.mxu0 0.0
      %616 = vmatmul.mubr.f32.gmra.mrb[0].mxu0 %v463
      %v617 = vpop.f32.mrb[0].mxu0
      %v618 = vadd.f32 0.0, %v617
      %v619 = vpop.f32.mrb[0].mxu0
      %620 = vmatprep.mubr.f32.mxu0 0.0
      %621 = vmatmul.mubr.f32.gmra.mrb[0].mxu0 %v464
      %v622 = vpop.f32.mrb[0].mxu0
      %v623 = vadd.f32 0.0, %v622
      %v624 = vpop.f32.mrb[0].mxu0
      %625 = vdwg.mxu0
      %v626 = vld [vmem:[%s4] sm:$0x1]
      %v628 = vlaneseq
      %v629 = vshrl.u32 %v628, 7
      %v630 = vsub.s32 0, %v629
      %v631 = vrot.slane %v626, %v630
      %v633 = vadd.f32 %v548, %v631
      %v634 = vadd.f32 %v553, %v631
      %v635 = vadd.f32 %v558, %v631
      %v636 = vadd.f32 %v563, %v631
      %v637 = vadd.f32 %v568, %v631
      %v638 = vadd.f32 %v573, %v631
      %v639 = vadd.f32 %v578, %v631
      %v640 = vadd.f32 %v583, %v631
      %v641 = vadd.f32 %v588, %v631
      %v642 = vadd.f32 %v593, %v631
      %v643 = vadd.f32 %v598, %v631
      %v644 = vadd.f32 %v603, %v631
      %v645 = vadd.f32 %v608, %v631
      %v646 = vadd.f32 %v613, %v631
      %v647 = vadd.f32 %v618, %v631
      %v648 = vadd.f32 %v623, %v631
      %vm649 = vcmask 31744
      %650 = vst.msk [vmem:[%s226] sm:$0xff] %vm649, %v633
      %651 = vst.msk [vmem:[%s226 + $0x8] sm:$0xff] %vm649, %v634
      %652 = vst.msk [vmem:[%s226 + $0x10] sm:$0xff] %vm649, %v635
      %653 = vst.msk [vmem:[%s226 + $0x18] sm:$0xff] %vm649, %v636
      %654 = vst.msk [vmem:[%s226 + $0x20] sm:$0xff] %vm649, %v637
      %655 = vst.msk [vmem:[%s226 + $0x28] sm:$0xff] %vm649, %v638
      %656 = vst.msk [vmem:[%s226 + $0x30] sm:$0xff] %vm649, %v639
      %657 = vst.msk [vmem:[%s226 + $0x38] sm:$0xff] %vm649, %v640
      %658 = vst.msk [vmem:[%s226 + $0x40] sm:$0xff] %vm649, %v641
      %659 = vst.msk [vmem:[%s226 + $0x48] sm:$0xff] %vm649, %v642
      %660 = vst.msk [vmem:[%s226 + $0x50] sm:$0xff] %vm649, %v643
      %661 = vst.msk [vmem:[%s226 + $0x58] sm:$0xff] %vm649, %v644
      %662 = vst.msk [vmem:[%s226 + $0x60] sm:$0xff] %vm649, %v645
      %663 = vst.msk [vmem:[%s226 + $0x68] sm:$0xff] %vm649, %v646
      %664 = vst.msk [vmem:[%s226 + $0x70] sm:$0xff] %vm649, %v647
      %665 = vst.msk [vmem:[%s226 + $0x78] sm:$0xff] %vm649, %v648
      %s666 = smul.u32 16, %s16
      %p667 = scmp.lt.s32.totalorder %s666, 31
      %s668 = scalar_select %p667, %s666, 31
      %s669 = smul.addr %s668, 8
      %s670 = scalar_lea.vmem %s5, %s669
      // Predicated region
      $region41: #{tpu_custom_call.1} parent=39 // pred_check
        %p671 = pneg %p144
      $region42: #{tpu_custom_call.1} parent=39 // pred_check_branch
        %673 = sbr.rel (%p671) target = $region44
      $region43: #{tpu_custom_call.1} parent=39 // pred_region
        %s674 = smul.u32 16, %s16
      $region44: #{tpu_custom_call.1} parent=39 // pred_fallthru
        _
    $region40: #{tpu_custom_call.1} parent=5 // pred_fallthru
      _
    %p675 = scmp.le.s32.totalorder 2, %s11
    // Predicated region
    $region45: #{tpu_custom_call.1} parent=5 // pred_check
      %p676 = pneg %p675
    $region46: #{tpu_custom_call.1} parent=5 // pred_check_branch
      %678 = sbr.rel (%p676) target = $region48
    $region47: #{tpu_custom_call.1} parent=5 // pred_region
      %s679 = ssub.s32 %s11, 2
      // Predicated region
      $region49: #{tpu_custom_call.1} parent=47 // pred_check
        %p680 = pneg %p150
      $region50: #{tpu_custom_call.1} parent=47 // pred_check_branch
        %682 = sbr.rel (%p680) target = $region52
      $region51: #{tpu_custom_call.1} parent=47 // pred_region
        %s683 = smul.u32 16, %s17
        %p684 = scmp.lt.s32.totalorder %s683, 31
        %s685 = scalar_select %p684, %s683, 31
        %s686 = smul.addr %s685, 8
        %s687 = scalar_lea.vmem %s5, %s686
      $region52: #{tpu_custom_call.1} parent=47 // pred_fallthru
        _
    $region48: #{tpu_custom_call.1} parent=5 // pred_fallthru
      _
  $region6: #{tpu_custom_call.1} parent=0 // loop_footer
    %s15 = sadd.s32 1, %s11
  $region7: #{tpu_custom_call.1} parent=0 // loop_footer_branch
    %10 = sbr.rel target = $region3
  $region8: #{tpu_custom_call.1} parent=0 // loop_exit
    _

</llo_original>
